<compile_context>
chip_gen: v5e
topology: v5e:2x2
jax: 0.10.0
libtpu: 0.0.40
codegen_flags: <defaults>
</compile_context>

<pallas_src>
import jax
import jax.numpy as jnp
from jax.experimental import pallas as pl
from jax.experimental.pallas import tpu as pltpu


def controller_actor_kernel(xg_ref, w1_ref, b1_ref, w2_ref, b2_ref,
                            w3_ref, b3_ref, scale_ref, o_ref):
    s = scale_ref[0]  # single SMEM scalar, read once

    # Layer 1: Linear(state_dim + goal_dim -> H) + ReLU (padded K=128, one MXU push).
    h1 = jnp.dot(xg_ref[...], w1_ref[...], preferred_element_type=jnp.float32)
    h1 = jnp.maximum(h1 + b1_ref[...], 0.0)

    # Layer 2: Linear(H -> H) + ReLU (bf16 MXU inputs, f32 accumulate + epilogue).
    h2 = jnp.dot(h1.astype(w2_ref.dtype), w2_ref[...],
                 preferred_element_type=jnp.float32)
    h2 = jnp.maximum(h2 + b2_ref[...], 0.0)

    # Layer 3: Linear(H -> action_dim) + tanh, then scale (max_action == 1 folded).
    a = jnp.dot(h2.astype(w3_ref.dtype), w3_ref[...],
                preferred_element_type=jnp.float32)
    o_ref[...] = s * jnp.tanh(a + b3_ref[...])


def _round_up(n, m):
    return ((n + m - 1) // m) * m


def _pad_to(a, shape):
    return jnp.pad(a, [(0, s - d) for d, s in zip(a.shape, shape)])


def prepare_params(params, *, compute_dtype=jnp.bfloat16):
    """One-time weight prep: zero-pad to lane-aligned shapes, cast matmul
    operands to bf16. Zero padding is exact under ReLU / tanh(0) = 0.
    Call once; pass the result to controller_actor_forward every step."""
    w1, b1, w2, b2, w3, b3, scale = params
    in_dim, hidden = w1.shape
    action_dim = w3.shape[1]
    Kp = _round_up(in_dim, 128)   # padded (state_dim + goal_dim), e.g. 24 -> 128
    Hp = _round_up(hidden, 128)   # padded hidden, 300 -> 384
    return {
        "w1": _pad_to(w1, (Kp, Hp)).astype(compute_dtype),
        "b1": _pad_to(b1.reshape(1, hidden), (1, Hp)).astype(jnp.float32),
        "w2": _pad_to(w2, (Hp, Hp)).astype(compute_dtype),
        "b2": _pad_to(b2.reshape(1, hidden), (1, Hp)).astype(jnp.float32),
        "w3": _pad_to(w3, (Hp, action_dim)).astype(compute_dtype),  # true action_dim
        "b3": b3.reshape(1, action_dim).astype(jnp.float32),
        "scale": jnp.asarray(scale, dtype=jnp.float32).reshape(1),
    }


def controller_actor_forward(x, g, prepared, *, max_batch_tile=512,
                             use_core_parallel=False):
    """x: [B, state_dim], g: [B, goal_dim] -> [B, action_dim] (float32)."""
    w1, b1, w2, b2, w3, b3, scale = (prepared[k] for k in
                                     ("w1", "b1", "w2", "b2", "w3", "b3", "scale"))
    B = x.shape[0]
    in_dim = x.shape[1] + g.shape[1]
    Kp, Hp = w1.shape
    action_dim = w3.shape[1]
    assert in_dim <= Kp, "x/g feature dims do not match the prepared W1"

    # Tiny per-call activation prep: concat (replaces torch.cat), bf16 cast,
    # zero-pad features to the aligned K used by the prepared W1.
    xg = jnp.concatenate([x, g], axis=1).astype(w1.dtype)
    if Kp > in_dim:
        xg = jnp.pad(xg, ((0, 0), (0, Kp - in_dim)))

    # Batch tiling: large tiles amortize per-grid-step overhead; no batch
    # padding -- a partial last tile is handled by masked loads/stores.
    tm = min(_round_up(B, 8), max_batch_tile)
    grid = (pl.cdiv(B, tm),)

    # CORE_PARALLEL actually shards batch tiles across v7x's two TensorCores;
    # plain "parallel" is the safe default on single-core v5e/v6e.
    batch_axis = pltpu.CORE_PARALLEL if use_core_parallel else "parallel"

    row_spec = lambda shape: pl.BlockSpec(shape, lambda i: (i, 0))    # batch-tiled
    # Constant block index -> weights/biases stay VMEM-resident across tiles.
    # (On v7x one could add pipeline_mode=pl.Buffered(1) here as VMEM hygiene.)
    const_spec = lambda shape: pl.BlockSpec(shape, lambda i: (0, 0))

    out = pl.pallas_call(
        controller_actor_kernel,
        out_shape=jax.ShapeDtypeStruct((B, action_dim), jnp.float32),
        grid=grid,
        in_specs=[
            row_spec((tm, Kp)),               # [x|g] tile
            const_spec((Kp, Hp)),             # W1
            const_spec((1, Hp)),              # b1
            const_spec((Hp, Hp)),             # W2
            const_spec((1, Hp)),              # b2
            const_spec((Hp, action_dim)),     # W3 (no lane padding)
            const_spec((1, action_dim)),      # b3
            pl.BlockSpec(memory_space=pltpu.MemorySpace.SMEM),  # scale scalar
        ],
        out_specs=row_spec((tm, action_dim)),   # true-width output: minimal HBM writes
        compiler_params=pltpu.CompilerParams(
            dimension_semantics=(batch_axis,),
            vmem_limit_bytes=32 << 20,
        ),
    )(xg, w1, b1, w2, b2, w3, b3, scale)

    return out


def init_params(key, state_dim, goal_dim, action_dim, hidden=300, scale=1.0):
    """Deterministic PyTorch-Linear-style init (uniform +/- 1/sqrt(fan_in))."""
    ks = jax.random.split(key, 6)
    in_dim = state_dim + goal_dim

    def lin(kw, kb, fan_in, fan_out):
        bound = 1.0 / jnp.sqrt(float(fan_in))
        w = jax.random.uniform(kw, (fan_in, fan_out), jnp.float32, -bound, bound)
        b = jax.random.uniform(kb, (fan_out,), jnp.float32, -bound, bound)
        return w, b

    w1, b1 = lin(ks[0], ks[1], in_dim, hidden)
    w2, b2 = lin(ks[2], ks[3], hidden, hidden)
    w3, b3 = lin(ks[4], ks[5], hidden, action_dim)
    scale_p = jnp.asarray(scale, dtype=jnp.float32)   # nn.Parameter(scale), no grad
    return (w1, b1, w2, b2, w3, b3, scale_p)


def reference_forward(x, g, params):
    w1, b1, w2, b2, w3, b3, scale = params
    xg = jnp.concatenate([x, g], axis=1)
    h1 = jax.nn.relu(xg @ w1 + b1)
    h2 = jax.nn.relu(h1 @ w2 + b2)
    return scale * (1.0 * jnp.tanh(h2 @ w3 + b3))


if __name__ == "__main__":
    # Small shapes consistent with the HIRO controller actor.
    batch, state_dim, goal_dim, action_dim = 8, 16, 8, 8

    key = jax.random.PRNGKey(0)
    kx, kg, kp = jax.random.split(key, 3)
    x = jax.random.normal(kx, (batch, state_dim), dtype=jnp.float32)
    g = jax.random.normal(kg, (batch, goal_dim), dtype=jnp.float32)
    params = init_params(kp, state_dim, goal_dim, action_dim, hidden=300, scale=1.0)

    prepared = prepare_params(params)              # one-time weight padding / casting
    fwd = jax.jit(controller_actor_forward)
    out = jax.block_until_ready(fwd(x, g, prepared))

    ref = reference_forward(x, g, params)
    assert out.shape == (batch, action_dim)
    # bf16 MXU inputs with f32 accumulation: relaxed tolerance vs the f32 reference.
    assert jnp.allclose(out, ref, atol=3e-2, rtol=3e-2), (
        "mismatch vs JAX reference; max abs diff = "
        f"{float(jnp.max(jnp.abs(out - ref)))}")

    print("KERNEL_OK")
</pallas_src>

<mosaic_0001>
module attributes {stable_mosaic.version = 11 : i64} {
  func.func @controller_actor_kernel(%arg0: i32, %arg1: memref<8x128xbf16, #tpu.memory_space<vmem>>, %arg2: memref<128x384xbf16, #tpu.memory_space<vmem>>, %arg3: memref<1x384xf32, #tpu.memory_space<vmem>>, %arg4: memref<384x384xbf16, #tpu.memory_space<vmem>>, %arg5: memref<1x384xf32, #tpu.memory_space<vmem>>, %arg6: memref<384x8xbf16, #tpu.memory_space<vmem>>, %arg7: memref<1x8xf32, #tpu.memory_space<vmem>>, %arg8: memref<1xf32, #tpu.memory_space<smem>>, %arg9: memref<8x8xf32, #tpu.memory_space<vmem>>) attributes {dimension_semantics = [#tpu.dimension_semantics<parallel>], iteration_bounds = array<i64: 1>, scalar_prefetch = 0 : i64, scratch_operands = 0 : i64, tpu.core_type = #tpu.core_type<tc>, window_params = [{transform_indices = @transform_0, window_bounds = array<i64: 8, 128>}, {pipeline_mode = #tpu.pipeline_mode<synchronous>, transform_indices = @transform_1, window_bounds = array<i64: 128, 384>}, {pipeline_mode = #tpu.pipeline_mode<synchronous>, transform_indices = @transform_2, window_bounds = array<i64: 1, 384>}, {pipeline_mode = #tpu.pipeline_mode<synchronous>, transform_indices = @transform_3, window_bounds = array<i64: 384, 384>}, {pipeline_mode = #tpu.pipeline_mode<synchronous>, transform_indices = @transform_4, window_bounds = array<i64: 1, 384>}, {pipeline_mode = #tpu.pipeline_mode<synchronous>, transform_indices = @transform_5, window_bounds = array<i64: 384, 8>}, {pipeline_mode = #tpu.pipeline_mode<synchronous>, transform_indices = @transform_6, window_bounds = array<i64: 1, 8>}, {transform_indices = @transform_7, window_bounds = array<i64: 1>}, {transform_indices = @transform_8, window_bounds = array<i64: 8, 8>}]} {
    %c0 = arith.constant 0 : index
    %0 = memref.load %arg8[%c0] : memref<1xf32, #tpu.memory_space<smem>>
    %c0_0 = arith.constant 0 : index
    %c0_1 = arith.constant 0 : index
    %1 = vector.load %arg1[%c0_0, %c0_1] : memref<8x128xbf16, #tpu.memory_space<vmem>>, vector<8x128xbf16>
    %c0_2 = arith.constant 0 : index
    %c0_3 = arith.constant 0 : index
    %2 = vector.load %arg2[%c0_2, %c0_3] : memref<128x384xbf16, #tpu.memory_space<vmem>>, vector<128x384xbf16>
    %cst = arith.constant dense<0.000000e+00> : vector<8x384xf32>
    %3 = tpu.matmul %1, %2, %cst {dimension_numbers = #tpu.dot_dimension_numbers<[1], [0], [0], [1], [0, 0, 1, 1], [], []>} : vector<8x128xbf16>, vector<128x384xbf16>, vector<8x384xf32> -> vector<8x384xf32>
    %c0_4 = arith.constant 0 : index
    %c0_5 = arith.constant 0 : index
    %4 = vector.load %arg3[%c0_4, %c0_5] : memref<1x384xf32, #tpu.memory_space<vmem>>, vector<1x384xf32>
    %5 = vector.broadcast %4 : vector<1x384xf32> to vector<8x384xf32>
    %6 = arith.addf %3, %5 : vector<8x384xf32>
    %cst_6 = arith.constant 0.000000e+00 : f32
    %7 = vector.broadcast %cst_6 : f32 to vector<8x384xf32>
    %8 = arith.maximumf %6, %7 : vector<8x384xf32>
    %9 = arith.truncf %8 : vector<8x384xf32> to vector<8x384xbf16>
    %c0_7 = arith.constant 0 : index
    %c0_8 = arith.constant 0 : index
    %10 = vector.load %arg4[%c0_7, %c0_8] : memref<384x384xbf16, #tpu.memory_space<vmem>>, vector<384x384xbf16>
    %cst_9 = arith.constant dense<0.000000e+00> : vector<8x384xf32>
    %11 = tpu.matmul %9, %10, %cst_9 {dimension_numbers = #tpu.dot_dimension_numbers<[1], [0], [0], [1], [0, 0, 1, 1], [], []>} : vector<8x384xbf16>, vector<384x384xbf16>, vector<8x384xf32> -> vector<8x384xf32>
    %c0_10 = arith.constant 0 : index
    %c0_11 = arith.constant 0 : index
    %12 = vector.load %arg5[%c0_10, %c0_11] : memref<1x384xf32, #tpu.memory_space<vmem>>, vector<1x384xf32>
    %13 = vector.broadcast %12 : vector<1x384xf32> to vector<8x384xf32>
    %14 = arith.addf %11, %13 : vector<8x384xf32>
    %cst_12 = arith.constant 0.000000e+00 : f32
    %15 = vector.broadcast %cst_12 : f32 to vector<8x384xf32>
    %16 = arith.maximumf %14, %15 : vector<8x384xf32>
    %17 = arith.truncf %16 : vector<8x384xf32> to vector<8x384xbf16>
    %c0_13 = arith.constant 0 : index
    %c0_14 = arith.constant 0 : index
    %18 = vector.load %arg6[%c0_13, %c0_14] : memref<384x8xbf16, #tpu.memory_space<vmem>>, vector<384x8xbf16>
    %cst_15 = arith.constant dense<0.000000e+00> : vector<8x8xf32>
    %19 = tpu.matmul %17, %18, %cst_15 {dimension_numbers = #tpu.dot_dimension_numbers<[1], [0], [0], [1], [0, 0, 1, 1], [], []>} : vector<8x384xbf16>, vector<384x8xbf16>, vector<8x8xf32> -> vector<8x8xf32>
    %c0_16 = arith.constant 0 : index
    %c0_17 = arith.constant 0 : index
    %20 = vector.load %arg7[%c0_16, %c0_17] : memref<1x8xf32, #tpu.memory_space<vmem>>, vector<1x8xf32>
    %21 = vector.broadcast %20 : vector<1x8xf32> to vector<8x8xf32>
    %22 = arith.addf %19, %21 : vector<8x8xf32>
    %23 = math.tanh %22 : vector<8x8xf32>
    %24 = vector.broadcast %0 : f32 to vector<8x8xf32>
    %25 = arith.mulf %24, %23 : vector<8x8xf32>
    %c0_18 = arith.constant 0 : index
    %c0_19 = arith.constant 0 : index
    %26 = vector.load %arg9[%c0_18, %c0_19] : memref<8x8xf32, #tpu.memory_space<vmem>>, vector<8x8xf32>
    tpu.vector_store %arg9[%c0_18, %c0_19], %25 {strides = array<i32>} : memref<8x8xf32, #tpu.memory_space<vmem>>, vector<8x8xf32>,
    return
  }
  func.func @transform_0(%arg0: i32) -> (i32, i32) {
    %c0_i32 = arith.constant 0 : i32
    %c0_i32_0 = arith.constant 0 : i32
    return %arg0, %c0_i32 : i32, i32
  }
  func.func @transform_1(%arg0: i32) -> (i32, i32) {
    %c0_i32 = arith.constant 0 : i32
    %c0_i32_0 = arith.constant 0 : i32
    %c0_i32_1 = arith.constant 0 : i32
    return %c0_i32, %c0_i32_0 : i32, i32
  }
  func.func @transform_2(%arg0: i32) -> (i32, i32) {
    %c0_i32 = arith.constant 0 : i32
    %c0_i32_0 = arith.constant 0 : i32
    %c0_i32_1 = arith.constant 0 : i32
    return %c0_i32, %c0_i32_0 : i32, i32
  }
  func.func @transform_3(%arg0: i32) -> (i32, i32) {
    %c0_i32 = arith.constant 0 : i32
    %c0_i32_0 = arith.constant 0 : i32
    %c0_i32_1 = arith.constant 0 : i32
    return %c0_i32, %c0_i32_0 : i32, i32
  }
  func.func @transform_4(%arg0: i32) -> (i32, i32) {
    %c0_i32 = arith.constant 0 : i32
    %c0_i32_0 = arith.constant 0 : i32
    %c0_i32_1 = arith.constant 0 : i32
    return %c0_i32, %c0_i32_0 : i32, i32
  }
  func.func @transform_5(%arg0: i32) -> (i32, i32) {
    %c0_i32 = arith.constant 0 : i32
    %c0_i32_0 = arith.constant 0 : i32
    %c0_i32_1 = arith.constant 0 : i32
    return %c0_i32, %c0_i32_0 : i32, i32
  }
  func.func @transform_6(%arg0: i32) -> (i32, i32) {
    %c0_i32 = arith.constant 0 : i32
    %c0_i32_0 = arith.constant 0 : i32
    %c0_i32_1 = arith.constant 0 : i32
    return %c0_i32, %c0_i32_0 : i32, i32
  }
  func.func @transform_7(%arg0: i32) -> i32 {
    %c0_i32 = arith.constant 0 : i32
    %c0_i32_0 = arith.constant 0 : i32
    return %c0_i32 : i32
  }
  func.func @transform_8(%arg0: i32) -> (i32, i32) {
    %c0_i32 = arith.constant 0 : i32
    %c0_i32_0 = arith.constant 0 : i32
    return %arg0, %c0_i32 : i32, i32
  }
}

</mosaic_0001>

<llo_original>
// kernel: controller_actor_forward.1
$region0: #{controller_actor_forward.1}
  #allocation0 [shape = 'u32[]', space=smem, size = 0x4, offset = 0x4, fixed_abs, tag = 'smem constant byte address 0x4 - core index']
  #allocation1 [shape = 'u32[72,128]{1,0:T(1,128)}', space=vmem, size = 0x9000, scoped, tag = 'internal scratch']
  #allocation2 [shape = 'f32[1]{0:T(128)S(6)}', space=smem, size = 0x200, scoped, tag = 'scoped memory for controller_actor_forward.1']
  %s0 = inlined_call_operand.vmem [shape: bf16[8,128], index: 0, kind: input, shape index: {}]
  %s1 = inlined_call_operand.vmem [shape: bf16[128,384], index: 1, kind: input, shape index: {}]
  %s2 = inlined_call_operand.vmem [shape: f32[1,384], index: 2, kind: input, shape index: {}]
  %s3 = inlined_call_operand.hbm [shape: bf16[384,384], index: 3, kind: input, shape index: {}]
  %s4 = inlined_call_operand.vmem [shape: f32[1,384], index: 4, kind: input, shape index: {}]
  %s5 = inlined_call_operand.vmem [shape: bf16[384,8], index: 5, kind: input, shape index: {}]
  %s6 = inlined_call_operand.vmem [shape: f32[1,8], index: 6, kind: input, shape index: {}]
  %s7 = inlined_call_operand.<no memory space> [shape: f32[1], index: 7, kind: input, shape index: {}]
  %s8 = inlined_call_operand.hbm [shape: f32[8,8], index: 8, kind: output, shape index: {}]
  %s9 = sld [smem:[#allocation0]]
  $region46: #{controller_actor_forward.1} parent=0
    _
  %s11 = ssub.s32 1, %s9
  %s12 = scalar_select 0, %s11, %s9
  %13 = sst [smem:[#allocation2]] %s7
  $region1: #{controller_actor_forward.1} parent=0
    #allocation3 [shape = 'u8[294912]{0}', space=vmem, size = 0x48000, scoped, tag = 'input window, operand 3, single buffered']
    #allocation4 [shape = 's32[1]{0}', space=sflag, size = 0x4, scoped, tag = 'scoped memory for controller_actor_forward.1']
    #allocation5 [shape = 's32[1]{0}', space=sflag, size = 0x4, scoped, tag = 'scoped memory for controller_actor_forward.1']
    #allocation6 [shape = 'u8[4096]{0}', space=vmem, size = 0x1000, scoped, tag = 'output window, operand 0, single buffered']
    %14 = vsyncpa [#allocation4], 0
    %15 = vsyncpa [#allocation5], 0
    // Predicated region
    $region2: #{controller_actor_forward.1} parent=1 // pred_check
      _
    $region3: #{controller_actor_forward.1} parent=1 // pred_check_branch
      %17 = sbr.rel (0) target = $region5
    $region4: #{controller_actor_forward.1} parent=1 // pred_region
      _
    $region5: #{controller_actor_forward.1} parent=1 // pred_fallthru
      _
    // Predicated region
    $region6: #{controller_actor_forward.1} parent=1 // pred_check
      _
    $region7: #{controller_actor_forward.1} parent=1 // pred_check_branch
      %19 = sbr.rel (0) target = $region9
    $region8: #{controller_actor_forward.1} parent=1 // pred_region
      _
    $region9: #{controller_actor_forward.1} parent=1 // pred_fallthru
      _
    // Predicated region
    $region10: #{controller_actor_forward.1} parent=1 // pred_check
      _
    $region11: #{controller_actor_forward.1} parent=1 // pred_check_branch
      %21 = sbr.rel (0) target = $region13
    $region12: #{controller_actor_forward.1} parent=1 // pred_region
      _
    $region13: #{controller_actor_forward.1} parent=1 // pred_fallthru
      _
    // Predicated region
    $region14: #{controller_actor_forward.1} parent=1 // pred_check
      _
    $region15: #{controller_actor_forward.1} parent=1 // pred_check_branch
      %23 = sbr.rel (0) target = $region17
    $region16: #{controller_actor_forward.1} parent=1 // pred_region
      %25 = vsyncadd [#allocation4], 0
      %s26 = sshll.u32 %s3, 4
      %s27 = int_to_ptr.hbm [resolvable:$true] %s26
      %s28 = sshll.u32 [#allocation3], 4
      %s29 = int_to_ptr.vmem [resolvable:$true] %s28
      %34 = dma.hbm_to_vmem [thread:$0]  %s27, 9216, %s29, [#allocation4], 192, 192, 12
    $region17: #{controller_actor_forward.1} parent=1 // pred_fallthru
      _
    // Predicated region
    $region18: #{controller_actor_forward.1} parent=1 // pred_check
      _
    $region19: #{controller_actor_forward.1} parent=1 // pred_check_branch
      %36 = sbr.rel (0) target = $region21
    $region20: #{controller_actor_forward.1} parent=1 // pred_region
      _
    $region21: #{controller_actor_forward.1} parent=1 // pred_fallthru
      _
    // Predicated region
    $region22: #{controller_actor_forward.1} parent=1 // pred_check
      _
    $region23: #{controller_actor_forward.1} parent=1 // pred_check_branch
      %38 = sbr.rel (0) target = $region25
    $region24: #{controller_actor_forward.1} parent=1 // pred_region
      _
    $region25: #{controller_actor_forward.1} parent=1 // pred_fallthru
      _
    // Predicated region
    $region26: #{controller_actor_forward.1} parent=1 // pred_check
      _
    $region27: #{controller_actor_forward.1} parent=1 // pred_check_branch
      %40 = sbr.rel (0) target = $region29
    $region28: #{controller_actor_forward.1} parent=1 // pred_region
      _
    $region29: #{controller_actor_forward.1} parent=1 // pred_fallthru
      _
    // Predicated region
    $region30: #{controller_actor_forward.1} parent=1 // pred_check
      _
    $region31: #{controller_actor_forward.1} parent=1 // pred_check_branch
      %42 = sbr.rel (0) target = $region33
    $region32: #{controller_actor_forward.1} parent=1 // pred_region
      _
    $region33: #{controller_actor_forward.1} parent=1 // pred_fallthru
      _
    // Predicated region
    $region34: #{controller_actor_forward.1} parent=1 // pred_check
      _
    $region35: #{controller_actor_forward.1} parent=1 // pred_check_branch
      %44 = sbr.rel (0) target = $region37
    $region36: #{controller_actor_forward.1} parent=1 // pred_region
      %46 = dma.done [#allocation4], 9216
    $region37: #{controller_actor_forward.1} parent=1 // pred_fallthru
      _
    %s47 = sld [smem:[#allocation2]]
    %v48 = vld [vmem:[%s0] sm:$0xf]
    %v49 = vld [vmem:[%s1] sm:$0xff]
    %v50 = vld [vmem:[%s1 + $0x8] sm:$0xf]
    %v51 = vld [vmem:[%s1 + $0xc] sm:$0xff]
    %v52 = vld [vmem:[%s1 + $0x14] sm:$0xf]
    %v53 = vld [vmem:[%s1 + $0x18] sm:$0xff]
    %v54 = vld [vmem:[%s1 + $0x20] sm:$0xf]
    %v55 = vld [vmem:[%s1 + $0x24] sm:$0xff]
    %v56 = vld [vmem:[%s1 + $0x2c] sm:$0xf]
    %v57 = vld [vmem:[%s1 + $0x30] sm:$0xff]
    %v58 = vld [vmem:[%s1 + $0x38] sm:$0xf]
    %v59 = vld [vmem:[%s1 + $0x3c] sm:$0xff]
    %v60 = vld [vmem:[%s1 + $0x44] sm:$0xf]
    %v61 = vld [vmem:[%s1 + $0x48] sm:$0xff]
    %v62 = vld [vmem:[%s1 + $0x50] sm:$0xf]
    %v63 = vld [vmem:[%s1 + $0x54] sm:$0xff]
    %v64 = vld [vmem:[%s1 + $0x5c] sm:$0xf]
    %v65 = vld [vmem:[%s1 + $0x60] sm:$0xff]
    %v66 = vld [vmem:[%s1 + $0x68] sm:$0xf]
    %v67 = vld [vmem:[%s1 + $0x6c] sm:$0xff]
    %v68 = vld [vmem:[%s1 + $0x74] sm:$0xf]
    %v69 = vld [vmem:[%s1 + $0x78] sm:$0xff]
    %v70 = vld [vmem:[%s1 + $0x80] sm:$0xf]
    %v71 = vld [vmem:[%s1 + $0x84] sm:$0xff]
    %v72 = vld [vmem:[%s1 + $0x8c] sm:$0xf]
    %v73 = vld [vmem:[%s1 + $0x90] sm:$0xff]
    %v74 = vld [vmem:[%s1 + $0x98] sm:$0xf]
    %v75 = vld [vmem:[%s1 + $0x9c] sm:$0xff]
    %v76 = vld [vmem:[%s1 + $0xa4] sm:$0xf]
    %v77 = vld [vmem:[%s1 + $0xa8] sm:$0xff]
    %v78 = vld [vmem:[%s1 + $0xb0] sm:$0xf]
    %v79 = vld [vmem:[%s1 + $0xb4] sm:$0xff]
    %v80 = vld [vmem:[%s1 + $0xbc] sm:$0xf]
    %v81 = vld [vmem:[%s2] sm:$0x7]
    %v83 = vperm.slane %v81, 0
    %v84 = vperm.slane %v81, 1
    %v85 = vperm.slane %v81, 2
    %v121 = vunpack.c.l.b16 %v49
    %v122 = vunpack.c.h.b16 %v49
    %v123 = vunpack.c.l.b16 %v50
    %v124 = vunpack.c.l.b16 %v51
    %v125 = vunpack.c.h.b16 %v51
    %v126 = vunpack.c.l.b16 %v52
    %v127 = vunpack.c.l.b16 %v53
    %v128 = vunpack.c.h.b16 %v53
    %v129 = vunpack.c.l.b16 %v54
    %v130 = vunpack.c.l.b16 %v55
    %v131 = vunpack.c.h.b16 %v55
    %v132 = vunpack.c.l.b16 %v56
    %v133 = vunpack.c.l.b16 %v57
    %v134 = vunpack.c.h.b16 %v57
    %v135 = vunpack.c.l.b16 %v58
    %v136 = vunpack.c.l.b16 %v59
    %v137 = vunpack.c.h.b16 %v59
    %v138 = vunpack.c.l.b16 %v60
    %v139 = vunpack.c.l.b16 %v61
    %v140 = vunpack.c.h.b16 %v61
    %v141 = vunpack.c.l.b16 %v62
    %v142 = vunpack.c.l.b16 %v63
    %v143 = vunpack.c.h.b16 %v63
    %v144 = vunpack.c.l.b16 %v64
    %v145 = vunpack.c.l.b16 %v65
    %v146 = vunpack.c.h.b16 %v65
    %v147 = vunpack.c.l.b16 %v66
    %v148 = vunpack.c.l.b16 %v67
    %v149 = vunpack.c.h.b16 %v67
    %v150 = vunpack.c.l.b16 %v68
    %v151 = vunpack.c.l.b16 %v69
    %v152 = vunpack.c.h.b16 %v69
    %v153 = vunpack.c.l.b16 %v70
    %v154 = vunpack.c.l.b16 %v71
    %v155 = vunpack.c.h.b16 %v71
    %v156 = vunpack.c.l.b16 %v72
    %v157 = vunpack.c.l.b16 %v73
    %v158 = vunpack.c.h.b16 %v73
    %v159 = vunpack.c.l.b16 %v74
    %v160 = vunpack.c.l.b16 %v75
    %v161 = vunpack.c.h.b16 %v75
    %v162 = vunpack.c.l.b16 %v76
    %v163 = vunpack.c.l.b16 %v77
    %v164 = vunpack.c.h.b16 %v77
    %v165 = vunpack.c.l.b16 %v78
    %v166 = vunpack.c.l.b16 %v79
    %v167 = vunpack.c.h.b16 %v79
    %v168 = vunpack.c.l.b16 %v80
    %v169 = vpack.c.b16 %v124, %v121
    %v170 = vpack.c.b16 %v125, %v122
    %v171 = vpack.c.b16 %v126, %v123
    %v172 = vpack.c.b16 %v130, %v127
    %v173 = vpack.c.b16 %v131, %v128
    %v174 = vpack.c.b16 %v132, %v129
    %v175 = vpack.c.b16 %v136, %v133
    %v176 = vpack.c.b16 %v137, %v134
    %v177 = vpack.c.b16 %v138, %v135
    %v178 = vpack.c.b16 %v142, %v139
    %v179 = vpack.c.b16 %v143, %v140
    %v180 = vpack.c.b16 %v144, %v141
    %v181 = vpack.c.b16 %v148, %v145
    %v182 = vpack.c.b16 %v149, %v146
    %v183 = vpack.c.b16 %v150, %v147
    %v184 = vpack.c.b16 %v154, %v151
    %v185 = vpack.c.b16 %v155, %v152
    %v186 = vpack.c.b16 %v156, %v153
    %v187 = vpack.c.b16 %v160, %v157
    %v188 = vpack.c.b16 %v161, %v158
    %v189 = vpack.c.b16 %v162, %v159
    %v190 = vpack.c.b16 %v166, %v163
    %v191 = vpack.c.b16 %v167, %v164
    %v192 = vpack.c.b16 %v168, %v165
    %217 = vmatpush.bf16.msra.mxu0 %v190
    %218 = vmatpush.bf16.msra.mxu0 %v187
    %219 = vmatpush.bf16.msra.mxu0 %v184
    %220 = vmatpush.bf16.msra.mxu0 %v181
    %221 = vmatpush.bf16.msra.mxu0 %v178
    %222 = vmatpush.bf16.msra.mxu0 %v175
    %223 = vmatpush.bf16.msra.mxu0 %v172
    %224 = vmatpush.bf16.msra.mxu0 %v169
    %225 = vmatmul.bf16.gmra.mxu0 %v48
    %v226 = vpop.f32.mrf.mxu0
    %v227 = vadd.f32 %v83, %v226
    %v228 = vpop.f32.mrf.mxu0
    %229 = vdwg.mxu0
    %230 = vmatpush.bf16.msra.mxu0 %v191
    %231 = vmatpush.bf16.msra.mxu0 %v188
    %232 = vmatpush.bf16.msra.mxu0 %v185
    %233 = vmatpush.bf16.msra.mxu0 %v182
    %234 = vmatpush.bf16.msra.mxu0 %v179
    %235 = vmatpush.bf16.msra.mxu0 %v176
    %236 = vmatpush.bf16.msra.mxu0 %v173
    %237 = vmatpush.bf16.msra.mxu0 %v170
    %238 = vmatmul.bf16.gmra.mxu0 %v48
    %v239 = vpop.f32.mrf.mxu0
    %v240 = vadd.f32 %v84, %v239
    %v241 = vpop.f32.mrf.mxu0
    %242 = vdwg.mxu0
    %243 = vmatpush.bf16.msra.mxu0 %v192
    %244 = vmatpush.bf16.msra.mxu0 %v189
    %245 = vmatpush.bf16.msra.mxu0 %v186
    %246 = vmatpush.bf16.msra.mxu0 %v183
    %247 = vmatpush.bf16.msra.mxu0 %v180
    %248 = vmatpush.bf16.msra.mxu0 %v177
    %249 = vmatpush.bf16.msra.mxu0 %v174
    %250 = vmatpush.bf16.msra.mxu0 %v171
    %251 = vmatmul.bf16.gmra.mxu0 %v48
    %v252 = vpop.f32.mrf.mxu0
    %v253 = vadd.f32 %v85, %v252
    %v254 = vpop.f32.mrf.mxu0
    %255 = vdwg.mxu0
    %v256 = vmax.f32 %v227, 0.0
    %v257 = vmax.f32 %v240, 0.0
    %v258 = vmax.f32 %v253, 0.0
    %v259 = vpack.c.bf16 %v256, %v256
    %v260 = vpack.c.bf16 %v257, %v257
    %v261 = vpack.c.bf16 %v258, %v258
    %v262 = vld [vmem:[#allocation3] sm:$0xff]
    %v263 = vld [vmem:[#allocation3 + $0x8] sm:$0xf]
    %v264 = vld [vmem:[#allocation3 + $0xc] sm:$0xff]
    %v265 = vld [vmem:[#allocation3 + $0x14] sm:$0xf]
    %v266 = vld [vmem:[#allocation3 + $0x18] sm:$0xff]
    %v267 = vld [vmem:[#allocation3 + $0x20] sm:$0xf]
    %v268 = vld [vmem:[#allocation3 + $0x24] sm:$0xff]
    %v269 = vld [vmem:[#allocation3 + $0x2c] sm:$0xf]
    %v270 = vld [vmem:[#allocation3 + $0x30] sm:$0xff]
    %v271 = vld [vmem:[#allocation3 + $0x38] sm:$0xf]
    %v272 = vld [vmem:[#allocation3 + $0x3c] sm:$0xff]
    %v273 = vld [vmem:[#allocation3 + $0x44] sm:$0xf]
    %v274 = vld [vmem:[#allocation3 + $0x48] sm:$0xff]
    %v275 = vld [vmem:[#allocation3 + $0x50] sm:$0xf]
    %v276 = vld [vmem:[#allocation3 + $0x54] sm:$0xff]
    %v277 = vld [vmem:[#allocation3 + $0x5c] sm:$0xf]
    %v278 = vld [vmem:[#allocation3 + $0x60] sm:$0xff]
    %v279 = vld [vmem:[#allocation3 + $0x68] sm:$0xf]
    %v280 = vld [vmem:[#allocation3 + $0x6c] sm:$0xff]
    %v281 = vld [vmem:[#allocation3 + $0x74] sm:$0xf]
    %v282 = vld [vmem:[#allocation3 + $0x78] sm:$0xff]
    %v283 = vld [vmem:[#allocation3 + $0x80] sm:$0xf]
    %v284 = vld [vmem:[#allocation3 + $0x84] sm:$0xff]
    %v285 = vld [vmem:[#allocation3 + $0x8c] sm:$0xf]
    %v286 = vld [vmem:[#allocation3 + $0x90] sm:$0xff]
    %v287 = vld [vmem:[#allocation3 + $0x98] sm:$0xf]
    %v288 = vld [vmem:[#allocation3 + $0x9c] sm:$0xff]
    %v289 = vld [vmem:[#allocation3 + $0xa4] sm:$0xf]
    %v290 = vld [vmem:[#allocation3 + $0xa8] sm:$0xff]
    %v291 = vld [vmem:[#allocation3 + $0xb0] sm:$0xf]
    %v292 = vld [vmem:[#allocation3 + $0xb4] sm:$0xff]
    %v293 = vld [vmem:[#allocation3 + $0xbc] sm:$0xf]
    %v294 = vld [vmem:[#allocation3 + $0xc0] sm:$0xff]
    %v295 = vld [vmem:[#allocation3 + $0xc8] sm:$0xf]
    %v296 = vld [vmem:[#allocation3 + $0xcc] sm:$0xff]
    %v297 = vld [vmem:[#allocation3 + $0xd4] sm:$0xf]
    %v298 = vld [vmem:[#allocation3 + $0xd8] sm:$0xff]
    %v299 = vld [vmem:[#allocation3 + $0xe0] sm:$0xf]
    %v300 = vld [vmem:[#allocation3 + $0xe4] sm:$0xff]
    %v301 = vld [vmem:[#allocation3 + $0xec] sm:$0xf]
    %v302 = vld [vmem:[#allocation3 + $0xf0] sm:$0xff]
    %v303 = vld [vmem:[#allocation3 + $0xf8] sm:$0xf]
    %v304 = vld [vmem:[#allocation3 + $0xfc] sm:$0xff]
    %v305 = vld [vmem:[#allocation3 + $0x104] sm:$0xf]
    %v306 = vld [vmem:[#allocation3 + $0x108] sm:$0xff]
    %v307 = vld [vmem:[#allocation3 + $0x110] sm:$0xf]
    %v308 = vld [vmem:[#allocation3 + $0x114] sm:$0xff]
    %v309 = vld [vmem:[#allocation3 + $0x11c] sm:$0xf]
    %v310 = vld [vmem:[#allocation3 + $0x120] sm:$0xff]
    %v311 = vld [vmem:[#allocation3 + $0x128] sm:$0xf]
    %v312 = vld [vmem:[#allocation3 + $0x12c] sm:$0xff]
    %v313 = vld [vmem:[#allocation3 + $0x134] sm:$0xf]
    %v314 = vld [vmem:[#allocation3 + $0x138] sm:$0xff]
    %v315 = vld [vmem:[#allocation3 + $0x140] sm:$0xf]
    %v316 = vld [vmem:[#allocation3 + $0x144] sm:$0xff]
    %v317 = vld [vmem:[#allocation3 + $0x14c] sm:$0xf]
    %v318 = vld [vmem:[#allocation3 + $0x150] sm:$0xff]
    %v319 = vld [vmem:[#allocation3 + $0x158] sm:$0xf]
    %v320 = vld [vmem:[#allocation3 + $0x15c] sm:$0xff]
    %v321 = vld [vmem:[#allocation3 + $0x164] sm:$0xf]
    %v322 = vld [vmem:[#allocation3 + $0x168] sm:$0xff]
    %v323 = vld [vmem:[#allocation3 + $0x170] sm:$0xf]
    %v324 = vld [vmem:[#allocation3 + $0x174] sm:$0xff]
    %v325 = vld [vmem:[#allocation3 + $0x17c] sm:$0xf]
    %v326 = vld [vmem:[#allocation3 + $0x180] sm:$0xff]
    %v327 = vld [vmem:[#allocation3 + $0x188] sm:$0xf]
    %v328 = vld [vmem:[#allocation3 + $0x18c] sm:$0xff]
    %v329 = vld [vmem:[#allocation3 + $0x194] sm:$0xf]
    %v330 = vld [vmem:[#allocation3 + $0x198] sm:$0xff]
    %v331 = vld [vmem:[#allocation3 + $0x1a0] sm:$0xf]
    %v332 = vld [vmem:[#allocation3 + $0x1a4] sm:$0xff]
    %v333 = vld [vmem:[#allocation3 + $0x1ac] sm:$0xf]
    %v334 = vld [vmem:[#allocation3 + $0x1b0] sm:$0xff]
    %v335 = vld [vmem:[#allocation3 + $0x1b8] sm:$0xf]
    %v336 = vld [vmem:[#allocation3 + $0x1bc] sm:$0xff]
    %v337 = vld [vmem:[#allocation3 + $0x1c4] sm:$0xf]
    %v338 = vld [vmem:[#allocation3 + $0x1c8] sm:$0xff]
    %v339 = vld [vmem:[#allocation3 + $0x1d0] sm:$0xf]
    %v340 = vld [vmem:[#allocation3 + $0x1d4] sm:$0xff]
    %v341 = vld [vmem:[#allocation3 + $0x1dc] sm:$0xf]
    %v342 = vld [vmem:[#allocation3 + $0x1e0] sm:$0xff]
    %v343 = vld [vmem:[#allocation3 + $0x1e8] sm:$0xf]
    %v344 = vld [vmem:[#allocation3 + $0x1ec] sm:$0xff]
    %v345 = vld [vmem:[#allocation3 + $0x1f4] sm:$0xf]
    %v346 = vld [vmem:[#allocation3 + $0x1f8] sm:$0xff]
    %v347 = vld [vmem:[#allocation3 + $0x200] sm:$0xf]
    %v348 = vld [vmem:[#allocation3 + $0x204] sm:$0xff]
    %v349 = vld [vmem:[#allocation3 + $0x20c] sm:$0xf]
    %v350 = vld [vmem:[#allocation3 + $0x210] sm:$0xff]
    %v351 = vld [vmem:[#allocation3 + $0x218] sm:$0xf]
    %v352 = vld [vmem:[#allocation3 + $0x21c] sm:$0xff]
    %v353 = vld [vmem:[#allocation3 + $0x224] sm:$0xf]
    %v354 = vld [vmem:[#allocation3 + $0x228] sm:$0xff]
    %v355 = vld [vmem:[#allocation3 + $0x230] sm:$0xf]
    %v356 = vld [vmem:[#allocation3 + $0x234] sm:$0xff]
    %v357 = vld [vmem:[#allocation3 + $0x23c] sm:$0xf]
    %v358 = vld [vmem:[%s4] sm:$0x7]
    %v360 = vperm.slane %v358, 0
    %v361 = vperm.slane %v358, 1
    %v362 = vperm.slane %v358, 2
    %v462 = vunpack.c.l.b16 %v262
    %v463 = vunpack.c.h.b16 %v262
    %v464 = vunpack.c.l.b16 %v263
    %v465 = vunpack.c.l.b16 %v264
    %v466 = vunpack.c.h.b16 %v264
    %v467 = vunpack.c.l.b16 %v265
    %v468 = vunpack.c.l.b16 %v266
    %v469 = vunpack.c.h.b16 %v266
    %v470 = vunpack.c.l.b16 %v267
    %v471 = vunpack.c.l.b16 %v268
    %v472 = vunpack.c.h.b16 %v268
    %v473 = vunpack.c.l.b16 %v269
    %v474 = vunpack.c.l.b16 %v270
    %v475 = vunpack.c.h.b16 %v270
    %v476 = vunpack.c.l.b16 %v271
    %v477 = vunpack.c.l.b16 %v272
    %v478 = vunpack.c.h.b16 %v272
    %v479 = vunpack.c.l.b16 %v273
    %v480 = vunpack.c.l.b16 %v274
    %v481 = vunpack.c.h.b16 %v274
    %v482 = vunpack.c.l.b16 %v275
    %v483 = vunpack.c.l.b16 %v276
    %v484 = vunpack.c.h.b16 %v276
    %v485 = vunpack.c.l.b16 %v277
    %v486 = vunpack.c.l.b16 %v278
    %v487 = vunpack.c.h.b16 %v278
    %v488 = vunpack.c.l.b16 %v279
    %v489 = vunpack.c.l.b16 %v280
    %v490 = vunpack.c.h.b16 %v280
    %v491 = vunpack.c.l.b16 %v281
    %v492 = vunpack.c.l.b16 %v282
    %v493 = vunpack.c.h.b16 %v282
    %v494 = vunpack.c.l.b16 %v283
    %v495 = vunpack.c.l.b16 %v284
    %v496 = vunpack.c.h.b16 %v284
    %v497 = vunpack.c.l.b16 %v285
    %v498 = vunpack.c.l.b16 %v286
    %v499 = vunpack.c.h.b16 %v286
    %v500 = vunpack.c.l.b16 %v287
    %v501 = vunpack.c.l.b16 %v288
    %v502 = vunpack.c.h.b16 %v288
    %v503 = vunpack.c.l.b16 %v289
    %v504 = vunpack.c.l.b16 %v290
    %v505 = vunpack.c.h.b16 %v290
    %v506 = vunpack.c.l.b16 %v291
    %v507 = vunpack.c.l.b16 %v292
    %v508 = vunpack.c.h.b16 %v292
    %v509 = vunpack.c.l.b16 %v293
    %v510 = vunpack.c.l.b16 %v294
    %v511 = vunpack.c.h.b16 %v294
    %v512 = vunpack.c.l.b16 %v295
    %v513 = vunpack.c.l.b16 %v296
    %v514 = vunpack.c.h.b16 %v296
    %v515 = vunpack.c.l.b16 %v297
    %v516 = vunpack.c.l.b16 %v298
    %v517 = vunpack.c.h.b16 %v298
    %v518 = vunpack.c.l.b16 %v299
    %v519 = vunpack.c.l.b16 %v300
    %v520 = vunpack.c.h.b16 %v300
    %v521 = vunpack.c.l.b16 %v301
    %v522 = vunpack.c.l.b16 %v302
    %v523 = vunpack.c.h.b16 %v302
    %v524 = vunpack.c.l.b16 %v303
    %v525 = vunpack.c.l.b16 %v304
    %v526 = vunpack.c.h.b16 %v304
    %v527 = vunpack.c.l.b16 %v305
    %v528 = vunpack.c.l.b16 %v306
    %v529 = vunpack.c.h.b16 %v306
    %v530 = vunpack.c.l.b16 %v307
    %v531 = vunpack.c.l.b16 %v308
    %v532 = vunpack.c.h.b16 %v308
    %v533 = vunpack.c.l.b16 %v309
    %v534 = vunpack.c.l.b16 %v310
    %v535 = vunpack.c.h.b16 %v310
    %v536 = vunpack.c.l.b16 %v311
    %v537 = vunpack.c.l.b16 %v312
    %v538 = vunpack.c.h.b16 %v312
    %v539 = vunpack.c.l.b16 %v313
    %v540 = vunpack.c.l.b16 %v314
    %v541 = vunpack.c.h.b16 %v314
    %v542 = vunpack.c.l.b16 %v315
    %v543 = vunpack.c.l.b16 %v316
    %v544 = vunpack.c.h.b16 %v316
    %v545 = vunpack.c.l.b16 %v317
    %v546 = vunpack.c.l.b16 %v318
    %v547 = vunpack.c.h.b16 %v318
    %v548 = vunpack.c.l.b16 %v319
    %v549 = vunpack.c.l.b16 %v320
    %v550 = vunpack.c.h.b16 %v320
    %v551 = vunpack.c.l.b16 %v321
    %v552 = vunpack.c.l.b16 %v322
    %v553 = vunpack.c.h.b16 %v322
    %v554 = vunpack.c.l.b16 %v323
    %v555 = vunpack.c.l.b16 %v324
    %v556 = vunpack.c.h.b16 %v324
    %v557 = vunpack.c.l.b16 %v325
    %v558 = vunpack.c.l.b16 %v326
    %v559 = vunpack.c.h.b16 %v326
    %v560 = vunpack.c.l.b16 %v327
    %v561 = vunpack.c.l.b16 %v328
    %v562 = vunpack.c.h.b16 %v328
    %v563 = vunpack.c.l.b16 %v329
    %v564 = vunpack.c.l.b16 %v330
    %v565 = vunpack.c.h.b16 %v330
    %v566 = vunpack.c.l.b16 %v331
    %v567 = vunpack.c.l.b16 %v332
    %v568 = vunpack.c.h.b16 %v332
    %v569 = vunpack.c.l.b16 %v333
    %v570 = vunpack.c.l.b16 %v334
    %v571 = vunpack.c.h.b16 %v334
    %v572 = vunpack.c.l.b16 %v335
    %v573 = vunpack.c.l.b16 %v336
    %v574 = vunpack.c.h.b16 %v336
    %v575 = vunpack.c.l.b16 %v337
    %v576 = vunpack.c.l.b16 %v338
    %v577 = vunpack.c.h.b16 %v338
    %v578 = vunpack.c.l.b16 %v339
    %v579 = vunpack.c.l.b16 %v340
    %v580 = vunpack.c.h.b16 %v340
    %v581 = vunpack.c.l.b16 %v341
    %v582 = vunpack.c.l.b16 %v342
    %v583 = vunpack.c.h.b16 %v342
    %v584 = vunpack.c.l.b16 %v343
    %v585 = vunpack.c.l.b16 %v344
    %v586 = vunpack.c.h.b16 %v344
    %v587 = vunpack.c.l.b16 %v345
    %v588 = vunpack.c.l.b16 %v346
    %v589 = vunpack.c.h.b16 %v346
    %v590 = vunpack.c.l.b16 %v347
    %v591 = vunpack.c.l.b16 %v348
    %v592 = vunpack.c.h.b16 %v348
    %v593 = vunpack.c.l.b16 %v349
    %v594 = vunpack.c.l.b16 %v350
    %v595 = vunpack.c.h.b16 %v350
    %v596 = vunpack.c.l.b16 %v351
    %v597 = vunpack.c.l.b16 %v352
    %v598 = vunpack.c.h.b16 %v352
    %v599 = vunpack.c.l.b16 %v353
    %v600 = vunpack.c.l.b16 %v354
    %v601 = vunpack.c.h.b16 %v354
    %v602 = vunpack.c.l.b16 %v355
    %v603 = vunpack.c.l.b16 %v356
    %v604 = vunpack.c.h.b16 %v356
    %v605 = vunpack.c.l.b16 %v357
    %v606 = vpack.c.b16 %v465, %v462
    %v607 = vpack.c.b16 %v466, %v463
    %v608 = vpack.c.b16 %v467, %v464
    %v609 = vpack.c.b16 %v471, %v468
    %v610 = vpack.c.b16 %v472, %v469
    %v611 = vpack.c.b16 %v473, %v470
    %v612 = vpack.c.b16 %v477, %v474
    %v613 = vpack.c.b16 %v478, %v475
    %v614 = vpack.c.b16 %v479, %v476
    %v615 = vpack.c.b16 %v483, %v480
    %v616 = vpack.c.b16 %v484, %v481
    %v617 = vpack.c.b16 %v485, %v482
    %v618 = vpack.c.b16 %v489, %v486
    %v619 = vpack.c.b16 %v490, %v487
    %v620 = vpack.c.b16 %v491, %v488
    %v621 = vpack.c.b16 %v495, %v492
    %v622 = vpack.c.b16 %v496, %v493
    %v623 = vpack.c.b16 %v497, %v494
    %v624 = vpack.c.b16 %v501, %v498
    %v625 = vpack.c.b16 %v502, %v499
    %v626 = vpack.c.b16 %v503, %v500
    %v627 = vpack.c.b16 %v507, %v504
    %v628 = vpack.c.b16 %v508, %v505
    %v629 = vpack.c.b16 %v509, %v506
    %v630 = vpack.c.b16 %v513, %v510
    %v631 = vpack.c.b16 %v514, %v511
    %v632 = vpack.c.b16 %v515, %v512
    %v633 = vpack.c.b16 %v519, %v516
    %v634 = vpack.c.b16 %v520, %v517
    %v635 = vpack.c.b16 %v521, %v518
    %v636 = vpack.c.b16 %v525, %v522
    %v637 = vpack.c.b16 %v526, %v523
    %v638 = vpack.c.b16 %v527, %v524
    %v639 = vpack.c.b16 %v531, %v528
    %v640 = vpack.c.b16 %v532, %v529
    %v641 = vpack.c.b16 %v533, %v530
    %v642 = vpack.c.b16 %v537, %v534
    %v643 = vpack.c.b16 %v538, %v535
    %v644 = vpack.c.b16 %v539, %v536
    %v645 = vpack.c.b16 %v543, %v540
    %v646 = vpack.c.b16 %v544, %v541
    %v647 = vpack.c.b16 %v545, %v542
    %v648 = vpack.c.b16 %v549, %v546
    %v649 = vpack.c.b16 %v550, %v547
    %v650 = vpack.c.b16 %v551, %v548
    %v651 = vpack.c.b16 %v555, %v552
    %v652 = vpack.c.b16 %v556, %v553
    %v653 = vpack.c.b16 %v557, %v554
    %v654 = vpack.c.b16 %v561, %v558
    %v655 = vpack.c.b16 %v562, %v559
    %v656 = vpack.c.b16 %v563, %v560
    %v657 = vpack.c.b16 %v567, %v564
    %v658 = vpack.c.b16 %v568, %v565
    %v659 = vpack.c.b16 %v569, %v566
    %v660 = vpack.c.b16 %v573, %v570
    %v661 = vpack.c.b16 %v574, %v571
    %v662 = vpack.c.b16 %v575, %v572
    %v663 = vpack.c.b16 %v579, %v576
    %v664 = vpack.c.b16 %v580, %v577
    %v665 = vpack.c.b16 %v581, %v578
    %v666 = vpack.c.b16 %v585, %v582
    %v667 = vpack.c.b16 %v586, %v583
    %v668 = vpack.c.b16 %v587, %v584
    %v669 = vpack.c.b16 %v591, %v588
    %v670 = vpack.c.b16 %v592, %v589
    %v671 = vpack.c.b16 %v593, %v590
    %v672 = vpack.c.b16 %v597, %v594
    %v673 = vpack.c.b16 %v598, %v595
    %v674 = vpack.c.b16 %v599, %v596
    %v675 = vpack.c.b16 %v603, %v600
    %v676 = vpack.c.b16 %v604, %v601
    %v677 = vpack.c.b16 %v605, %v602
    %750 = vmatpush.bf16.msra.mxu0 %v627
    %751 = vmatpush.bf16.msra.mxu0 %v624
    %752 = vmatpush.bf16.msra.mxu0 %v621
    %753 = vmatpush.bf16.msra.mxu0 %v618
    %754 = vmatpush.bf16.msra.mxu0 %v615
    %755 = vmatpush.bf16.msra.mxu0 %v612
    %756 = vmatpush.bf16.msra.mxu0 %v609
    %757 = vmatpush.bf16.msra.mxu0 %v606
    %758 = vmatmul.bf16.gmra.mxu0 %v259
    %v759 = vpop.f32.mrf.mxu0
    %v760 = vadd.f32 %v360, %v759
    %v761 = vpop.f32.mrf.mxu0
    %762 = vdwg.mxu0
    %763 = vmatpush.bf16.msra.mxu0 %v651
    %764 = vmatpush.bf16.msra.mxu0 %v648
    %765 = vmatpush.bf16.msra.mxu0 %v645
    %766 = vmatpush.bf16.msra.mxu0 %v642
    %767 = vmatpush.bf16.msra.mxu0 %v639
    %768 = vmatpush.bf16.msra.mxu0 %v636
    %769 = vmatpush.bf16.msra.mxu0 %v633
    %770 = vmatpush.bf16.msra.mxu0 %v630
    %771 = vmatmul.bf16.gmra.mxu0 %v260
    %v772 = vpop.f32.mrf.mxu0
    %v773 = vadd.f32 %v760, %v772
    %v774 = vpop.f32.mrf.mxu0
    %775 = vdwg.mxu0
    %776 = vmatpush.bf16.msra.mxu0 %v675
    %777 = vmatpush.bf16.msra.mxu0 %v672
    %778 = vmatpush.bf16.msra.mxu0 %v669
    %779 = vmatpush.bf16.msra.mxu0 %v666
    %780 = vmatpush.bf16.msra.mxu0 %v663
    %781 = vmatpush.bf16.msra.mxu0 %v660
    %782 = vmatpush.bf16.msra.mxu0 %v657
    %783 = vmatpush.bf16.msra.mxu0 %v654
    %784 = vmatmul.bf16.gmra.mxu0 %v261
    %v785 = vpop.f32.mrf.mxu0
    %v786 = vadd.f32 %v773, %v785
    %v787 = vpop.f32.mrf.mxu0
    %788 = vdwg.mxu0
    %789 = vmatpush.bf16.msra.mxu0 %v628
    %790 = vmatpush.bf16.msra.mxu0 %v625
    %791 = vmatpush.bf16.msra.mxu0 %v622
    %792 = vmatpush.bf16.msra.mxu0 %v619
    %793 = vmatpush.bf16.msra.mxu0 %v616
    %794 = vmatpush.bf16.msra.mxu0 %v613
    %795 = vmatpush.bf16.msra.mxu0 %v610
    %796 = vmatpush.bf16.msra.mxu0 %v607
    %797 = vmatmul.bf16.gmra.mxu0 %v259
    %v798 = vpop.f32.mrf.mxu0
    %v799 = vadd.f32 %v361, %v798
    %v800 = vpop.f32.mrf.mxu0
    %801 = vdwg.mxu0
    %802 = vmatpush.bf16.msra.mxu0 %v652
    %803 = vmatpush.bf16.msra.mxu0 %v649
    %804 = vmatpush.bf16.msra.mxu0 %v646
    %805 = vmatpush.bf16.msra.mxu0 %v643
    %806 = vmatpush.bf16.msra.mxu0 %v640
    %807 = vmatpush.bf16.msra.mxu0 %v637
    %808 = vmatpush.bf16.msra.mxu0 %v634
    %809 = vmatpush.bf16.msra.mxu0 %v631
    %810 = vmatmul.bf16.gmra.mxu0 %v260
    %v811 = vpop.f32.mrf.mxu0
    %v812 = vadd.f32 %v799, %v811
    %v813 = vpop.f32.mrf.mxu0
    %814 = vdwg.mxu0
    %815 = vmatpush.bf16.msra.mxu0 %v676
    %816 = vmatpush.bf16.msra.mxu0 %v673
    %817 = vmatpush.bf16.msra.mxu0 %v670
    %818 = vmatpush.bf16.msra.mxu0 %v667
    %819 = vmatpush.bf16.msra.mxu0 %v664
    %820 = vmatpush.bf16.msra.mxu0 %v661
    %821 = vmatpush.bf16.msra.mxu0 %v658
    %822 = vmatpush.bf16.msra.mxu0 %v655
    %823 = vmatmul.bf16.gmra.mxu0 %v261
    %v824 = vpop.f32.mrf.mxu0
    %v825 = vadd.f32 %v812, %v824
    %v826 = vpop.f32.mrf.mxu0
    %827 = vdwg.mxu0
    %828 = vmatpush.bf16.msra.mxu0 %v629
    %829 = vmatpush.bf16.msra.mxu0 %v626
    %830 = vmatpush.bf16.msra.mxu0 %v623
    %831 = vmatpush.bf16.msra.mxu0 %v620
    %832 = vmatpush.bf16.msra.mxu0 %v617
    %833 = vmatpush.bf16.msra.mxu0 %v614
    %834 = vmatpush.bf16.msra.mxu0 %v611
    %835 = vmatpush.bf16.msra.mxu0 %v608
    %836 = vmatmul.bf16.gmra.mxu0 %v259
    %v837 = vpop.f32.mrf.mxu0
    %v838 = vadd.f32 %v362, %v837
    %v839 = vpop.f32.mrf.mxu0
    %840 = vdwg.mxu0
    %841 = vmatpush.bf16.msra.mxu0 %v653
    %842 = vmatpush.bf16.msra.mxu0 %v650
    %843 = vmatpush.bf16.msra.mxu0 %v647
    %844 = vmatpush.bf16.msra.mxu0 %v644
    %845 = vmatpush.bf16.msra.mxu0 %v641
    %846 = vmatpush.bf16.msra.mxu0 %v638
    %847 = vmatpush.bf16.msra.mxu0 %v635
    %848 = vmatpush.bf16.msra.mxu0 %v632
    %849 = vmatmul.bf16.gmra.mxu0 %v260
    %v850 = vpop.f32.mrf.mxu0
    %v851 = vadd.f32 %v838, %v850
    %v852 = vpop.f32.mrf.mxu0
    %853 = vdwg.mxu0
    %854 = vmatpush.bf16.msra.mxu0 %v677
    %855 = vmatpush.bf16.msra.mxu0 %v674
    %856 = vmatpush.bf16.msra.mxu0 %v671
    %857 = vmatpush.bf16.msra.mxu0 %v668
    %858 = vmatpush.bf16.msra.mxu0 %v665
    %859 = vmatpush.bf16.msra.mxu0 %v662
    %860 = vmatpush.bf16.msra.mxu0 %v659
    %861 = vmatpush.bf16.msra.mxu0 %v656
    %862 = vmatmul.bf16.gmra.mxu0 %v261
    %v863 = vpop.f32.mrf.mxu0
    %v864 = vadd.f32 %v851, %v863
    %v865 = vpop.f32.mrf.mxu0
    %866 = vdwg.mxu0
    %v867 = vmax.f32 %v786, 0.0
    %v868 = vmax.f32 %v825, 0.0
    %v869 = vmax.f32 %v864, 0.0
    %v870 = vpack.c.bf16 %v867, %v867
    %v871 = vpack.c.bf16 %v868, %v868
    %v872 = vpack.c.bf16 %v869, %v869
    %v873 = vld [vmem:[%s5] sm:$0xf]
    %v874 = vld [vmem:[%s5 + $0x4] sm:$0xf]
    %v875 = vld [vmem:[%s5 + $0x8] sm:$0xf]
    %v876 = vld [vmem:[%s5 + $0xc] sm:$0xf]
    %v877 = vld [vmem:[%s5 + $0x10] sm:$0xf]
    %v878 = vld [vmem:[%s5 + $0x14] sm:$0xf]
    %v879 = vld [vmem:[%s5 + $0x18] sm:$0xf]
    %v880 = vld [vmem:[%s5 + $0x1c] sm:$0xf]
    %v881 = vld [vmem:[%s5 + $0x20] sm:$0xf]
    %v882 = vld [vmem:[%s5 + $0x24] sm:$0xf]
    %v883 = vld [vmem:[%s5 + $0x28] sm:$0xf]
    %v884 = vld [vmem:[%s5 + $0x2c] sm:$0xf]
    %v885 = vld [vmem:[%s5 + $0x30] sm:$0xf]
    %v886 = vld [vmem:[%s5 + $0x34] sm:$0xf]
    %v887 = vld [vmem:[%s5 + $0x38] sm:$0xf]
    %v888 = vld [vmem:[%s5 + $0x3c] sm:$0xf]
    %v889 = vld [vmem:[%s5 + $0x40] sm:$0xf]
    %v890 = vld [vmem:[%s5 + $0x44] sm:$0xf]
    %v891 = vld [vmem:[%s5 + $0x48] sm:$0xf]
    %v892 = vld [vmem:[%s5 + $0x4c] sm:$0xf]
    %v893 = vld [vmem:[%s5 + $0x50] sm:$0xf]
    %v894 = vld [vmem:[%s5 + $0x54] sm:$0xf]
    %v895 = vld [vmem:[%s5 + $0x58] sm:$0xf]
    %v896 = vld [vmem:[%s5 + $0x5c] sm:$0xf]
    %v897 = vld [vmem:[%s5 + $0x60] sm:$0xf]
    %v898 = vld [vmem:[%s5 + $0x64] sm:$0xf]
    %v899 = vld [vmem:[%s5 + $0x68] sm:$0xf]
    %v900 = vld [vmem:[%s5 + $0x6c] sm:$0xf]
    %v901 = vld [vmem:[%s5 + $0x70] sm:$0xf]
    %v902 = vld [vmem:[%s5 + $0x74] sm:$0xf]
    %v903 = vld [vmem:[%s5 + $0x78] sm:$0xf]
    %v904 = vld [vmem:[%s5 + $0x7c] sm:$0xf]
    %v905 = vld [vmem:[%s5 + $0x80] sm:$0xf]
    %v906 = vld [vmem:[%s5 + $0x84] sm:$0xf]
    %v907 = vld [vmem:[%s5 + $0x88] sm:$0xf]
    %v908 = vld [vmem:[%s5 + $0x8c] sm:$0xf]
    %v909 = vld [vmem:[%s5 + $0x90] sm:$0xf]
    %v910 = vld [vmem:[%s5 + $0x94] sm:$0xf]
    %v911 = vld [vmem:[%s5 + $0x98] sm:$0xf]
    %v912 = vld [vmem:[%s5 + $0x9c] sm:$0xf]
    %v913 = vld [vmem:[%s5 + $0xa0] sm:$0xf]
    %v914 = vld [vmem:[%s5 + $0xa4] sm:$0xf]
    %v915 = vld [vmem:[%s5 + $0xa8] sm:$0xf]
    %v916 = vld [vmem:[%s5 + $0xac] sm:$0xf]
    %v917 = vld [vmem:[%s5 + $0xb0] sm:$0xf]
    %v918 = vld [vmem:[%s5 + $0xb4] sm:$0xf]
    %v919 = vld [vmem:[%s5 + $0xb8] sm:$0xf]
    %v920 = vld [vmem:[%s5 + $0xbc] sm:$0xf]
    %v921 = vld [vmem:[%s6] sm:$0x1]
    %v923 = vperm.slane %v921, 0
    %v973 = vunpack.c.l.b16 %v873
    %v974 = vunpack.c.l.b16 %v874
    %v975 = vunpack.c.l.b16 %v875
    %v976 = vunpack.c.l.b16 %v876
    %v977 = vunpack.c.l.b16 %v877
    %v978 = vunpack.c.l.b16 %v878
    %v979 = vunpack.c.l.b16 %v879
    %v980 = vunpack.c.l.b16 %v880
    %v981 = vunpack.c.l.b16 %v881
    %v982 = vunpack.c.l.b16 %v882
    %v983 = vunpack.c.l.b16 %v883
    %v984 = vunpack.c.l.b16 %v884
    %v985 = vunpack.c.l.b16 %v885
    %v986 = vunpack.c.l.b16 %v886
    %v987 = vunpack.c.l.b16 %v887
    %v988 = vunpack.c.l.b16 %v888
    %v989 = vunpack.c.l.b16 %v889
    %v990 = vunpack.c.l.b16 %v890
    %v991 = vunpack.c.l.b16 %v891
    %v992 = vunpack.c.l.b16 %v892
    %v993 = vunpack.c.l.b16 %v893
    %v994 = vunpack.c.l.b16 %v894
    %v995 = vunpack.c.l.b16 %v895
    %v996 = vunpack.c.l.b16 %v896
    %v997 = vunpack.c.l.b16 %v897
    %v998 = vunpack.c.l.b16 %v898
    %v999 = vunpack.c.l.b16 %v899
    %v1000 = vunpack.c.l.b16 %v900
    %v1001 = vunpack.c.l.b16 %v901
    %v1002 = vunpack.c.l.b16 %v902
    %v1003 = vunpack.c.l.b16 %v903
    %v1004 = vunpack.c.l.b16 %v904
    %v1005 = vunpack.c.l.b16 %v905
    %v1006 = vunpack.c.l.b16 %v906
    %v1007 = vunpack.c.l.b16 %v907
    %v1008 = vunpack.c.l.b16 %v908
    %v1009 = vunpack.c.l.b16 %v909
    %v1010 = vunpack.c.l.b16 %v910
    %v1011 = vunpack.c.l.b16 %v911
    %v1012 = vunpack.c.l.b16 %v912
    %v1013 = vunpack.c.l.b16 %v913
    %v1014 = vunpack.c.l.b16 %v914
    %v1015 = vunpack.c.l.b16 %v915
    %v1016 = vunpack.c.l.b16 %v916
    %v1017 = vunpack.c.l.b16 %v917
    %v1018 = vunpack.c.l.b16 %v918
    %v1019 = vunpack.c.l.b16 %v919
    %v1020 = vunpack.c.l.b16 %v920
    %v1021 = vpack.c.b16 %v974, %v973
    %v1022 = vpack.c.b16 %v976, %v975
    %v1023 = vpack.c.b16 %v978, %v977
    %v1024 = vpack.c.b16 %v980, %v979
    %v1025 = vpack.c.b16 %v982, %v981
    %v1026 = vpack.c.b16 %v984, %v983
    %v1027 = vpack.c.b16 %v986, %v985
    %v1028 = vpack.c.b16 %v988, %v987
    %v1029 = vpack.c.b16 %v990, %v989
    %v1030 = vpack.c.b16 %v992, %v991
    %v1031 = vpack.c.b16 %v994, %v993
    %v1032 = vpack.c.b16 %v996, %v995
    %v1033 = vpack.c.b16 %v998, %v997
    %v1034 = vpack.c.b16 %v1000, %v999
    %v1035 = vpack.c.b16 %v1002, %v1001
    %v1036 = vpack.c.b16 %v1004, %v1003
    %v1037 = vpack.c.b16 %v1006, %v1005
    %v1038 = vpack.c.b16 %v1008, %v1007
    %v1039 = vpack.c.b16 %v1010, %v1009
    %v1040 = vpack.c.b16 %v1012, %v1011
    %v1041 = vpack.c.b16 %v1014, %v1013
    %v1042 = vpack.c.b16 %v1016, %v1015
    %v1043 = vpack.c.b16 %v1018, %v1017
    %v1044 = vpack.c.b16 %v1020, %v1019
    %1069 = vmatpush.bf16.msra.mxu0 %v1028
    %1070 = vmatpush.bf16.msra.mxu0 %v1027
    %1071 = vmatpush.bf16.msra.mxu0 %v1026
    %1072 = vmatpush.bf16.msra.mxu0 %v1025
    %1073 = vmatpush.bf16.msra.mxu0 %v1024
    %1074 = vmatpush.bf16.msra.mxu0 %v1023
    %1075 = vmatpush.bf16.msra.mxu0 %v1022
    %1076 = vmatpush.bf16.msra.mxu0 %v1021
    %1077 = vmatmul.bf16.gmra.mxu0 %v870
    %v1078 = vpop.f32.mrf.mxu0
    %v1079 = vadd.f32 %v923, %v1078
    %v1080 = vpop.f32.mrf.mxu0
    %1081 = vdwg.mxu0
    %1082 = vmatpush.bf16.msra.mxu0 %v1036
    %1083 = vmatpush.bf16.msra.mxu0 %v1035
    %1084 = vmatpush.bf16.msra.mxu0 %v1034
    %1085 = vmatpush.bf16.msra.mxu0 %v1033
    %1086 = vmatpush.bf16.msra.mxu0 %v1032
    %1087 = vmatpush.bf16.msra.mxu0 %v1031
    %1088 = vmatpush.bf16.msra.mxu0 %v1030
    %1089 = vmatpush.bf16.msra.mxu0 %v1029
    %1090 = vmatmul.bf16.gmra.mxu0 %v871
    %v1091 = vpop.f32.mrf.mxu0
    %v1092 = vadd.f32 %v1079, %v1091
    %v1093 = vpop.f32.mrf.mxu0
    %1094 = vdwg.mxu0
    %1095 = vmatpush.bf16.msra.mxu0 %v1044
    %1096 = vmatpush.bf16.msra.mxu0 %v1043
    %1097 = vmatpush.bf16.msra.mxu0 %v1042
    %1098 = vmatpush.bf16.msra.mxu0 %v1041
    %1099 = vmatpush.bf16.msra.mxu0 %v1040
    %1100 = vmatpush.bf16.msra.mxu0 %v1039
    %1101 = vmatpush.bf16.msra.mxu0 %v1038
    %1102 = vmatpush.bf16.msra.mxu0 %v1037
    %1103 = vmatmul.bf16.gmra.mxu0 %v872
    %v1104 = vpop.f32.mrf.mxu0
    %v1105 = vadd.f32 %v1092, %v1104
    %v1106 = vpop.f32.mrf.mxu0
    %1107 = vdwg.mxu0
    %v1108 = vtanh.pop %v1105
    %v1109 = vstv %s47
    %v1110 = vmul.f32 %v1109, %v1108
    %vm1111 = vcmask 64512
    %1112 = vst.msk [vmem:[#allocation6] sm:$0xff] %vm1111, %v1110
    // Predicated region
    $region38: #{controller_actor_forward.1} parent=1 // pred_check
      _
    $region39: #{controller_actor_forward.1} parent=1 // pred_check_branch
      %1114 = sbr.rel (0) target = $region41
    $region40: #{controller_actor_forward.1} parent=1 // pred_region
      %1116 = vsyncadd [#allocation5], 0
      %s1118 = sshll.u32 [#allocation6], 4
      %s1119 = int_to_ptr.vmem [resolvable:$true] %s1118
      %s1120 = sshll.u32 %s8, 4
      %s1121 = int_to_ptr.hbm [resolvable:$true] %s1120
      %1123 = dma.vmem_to_hbm [thread:$0]  %s1119, 128, %s1121, [#allocation5]
    $region41: #{controller_actor_forward.1} parent=1 // pred_fallthru
      _
    // Predicated region
    $region42: #{controller_actor_forward.1} parent=1 // pred_check
      _
    $region43: #{controller_actor_forward.1} parent=1 // pred_check_branch
      %1125 = sbr.rel (0) target = $region45
    $region44: #{controller_actor_forward.1} parent=1 // pred_region
      %1127 = dma.done [#allocation5], 128
    $region45: #{controller_actor_forward.1} parent=1 // pred_fallthru
      _
    %1128 = vsyncpa [#allocation4], 1
    %1129 = vsyncpa [#allocation5], 1

</llo_original>
